<compile_context>
chip_gen: v5e
topology: v5e:2x2
jax: 0.10.0
libtpu: 0.0.40
codegen_flags: <defaults>
</compile_context>

<pallas_src>
import functools
import math

import jax
import jax.numpy as jnp
from jax.experimental import pallas as pl
from jax.experimental.pallas import tpu as pltpu


def _styled_conv_kernel(w_ref, x_ref, nz_ref, ab_ref, ns_ref, o_ref, *,
                        k, Wp, Jout, negative_slope, act_scale):
    """One batch sample per grid step.

    w_ref : (k*k, Cout, Cin)   per-sample modulated+demodulated weight (VMEM)
    x_ref : (Cin, Hp*Wp + k-1) zero-padded input, spatially flattened (VMEM)
    nz_ref: (1, Jout)          noise plane, width-padded to Wp (VMEM)
    ab_ref: (Cout, 1)          FusedLeakyReLU per-channel bias (VMEM)
    ns_ref: (1, 1)             NoiseInjection strength (SMEM scalar)
    o_ref : (Cout, Jout)       channel-major output, Jout = Hout*Wp (lane-dense)
    """
    cout = w_ref.shape[1]
    acc = jnp.zeros((cout, Jout), dtype=jnp.float32)

    # Fused im2col: tap (kh, kw) of the conv is a contiguous slice of the
    # flattened padded image starting at kh*Wp + kw -> one small MXU matmul.
    for kh in range(k):
        for kw in range(k):
            s = kh * Wp + kw
            xs = x_ref[:, s:s + Jout]                      # (Cin, Jout)
            wt = w_ref[kh * k + kw]                        # (Cout, Cin)
            acc = acc + jnp.dot(wt, xs, preferred_element_type=jnp.float32)

    # NoiseInjection: out + strength * noise (broadcast over channels).
    acc = acc + ns_ref[0, 0] * nz_ref[...]
    # FusedLeakyReLU: leaky_relu(out + bias) * sqrt(2).
    acc = acc + ab_ref[...]
    acc = jnp.where(acc >= 0.0, acc, negative_slope * acc) * act_scale
    o_ref[...] = acc.astype(o_ref.dtype)


def styled_conv(x, style, noise, params, *, demodulate=True,
                negative_slope=0.2, act_scale=math.sqrt(2.0), eps=1e-8):
    """StyledConv forward (default config: upsample=False, stride-1 'same' conv)."""
    N, Cin, H, W = x.shape
    weight = params["conv_weight"]                        # (1, Cout, Cin, k, k)
    _, Cout, Cin_w, k, k2 = weight.shape
    assert Cin_w == Cin and k == k2 and k % 2 == 1

    pad = k // 2
    Hout, Wout = H, W                                     # stride-1 'same' conv
    Hp, Wp = H + 2 * pad, W + 2 * pad
    Jout = Hout * Wp                                      # expanded (width-Wp) flat output length
    Lx = Hp * Wp + (k - 1)

    # --- tiny per-sample weight math (modulation + demodulation), plain JAX.
    #     Equalized-lr scale is folded in ONCE here (never rescaled in-kernel).
    if style is not None:
        mod_w = params["mod_weight"]                      # (Cin, style_dim)
        mod_scale = 1.0 / math.sqrt(mod_w.shape[1])
        s = style @ (mod_w * mod_scale).T + params["mod_bias"]     # (N, Cin)
    else:
        s = jnp.ones((N, Cin), dtype=x.dtype)
    conv_scale = 1.0 / math.sqrt(Cin * k * k)
    w = conv_scale * weight * s[:, None, :, None, None]            # (N, Cout, Cin, k, k)
    if demodulate:
        demod = jax.lax.rsqrt(jnp.sum(w * w, axis=(2, 3, 4)) + eps)
        w = w * demod[:, :, None, None, None]
    # tap-major layout for the kernel: (N, k*k, Cout, Cin)
    w_taps = jnp.transpose(w, (0, 3, 4, 1, 2)).reshape(N, k * k, Cout, Cin)
    w_taps = w_taps.astype(jnp.float32)

    # --- input stays NCHW (no transposes): zero-pad spatially, flatten H*W.
    x_pad = jnp.pad(x.astype(jnp.float32),
                    ((0, 0), (0, 0), (pad, pad), (pad, pad)))
    x_flat = x_pad.reshape(N, Cin, Hp * Wp)
    x_flat = jnp.pad(x_flat, ((0, 0), (0, 0), (0, k - 1)))          # (N, Cin, Lx)

    # --- noise plane, width-padded to Wp so its lane index matches the output.
    if noise is None:
        noise_flat = jnp.zeros((N, 1, Jout), dtype=jnp.float32)
        noise_strength = jnp.zeros((1, 1), dtype=jnp.float32)
    else:
        noise_flat = jnp.pad(noise.astype(jnp.float32),
                             ((0, 0), (0, 0), (0, 0), (0, Wp - Wout)))
        noise_flat = noise_flat.reshape(N, 1, Jout)
        noise_strength = jnp.asarray(params["noise_strength"],
                                     dtype=jnp.float32).reshape(1, 1)

    act_bias = params["act_bias"].reshape(Cout, 1).astype(jnp.float32)

    kern = functools.partial(_styled_conv_kernel, k=k, Wp=Wp, Jout=Jout,
                             negative_slope=negative_slope, act_scale=act_scale)

    out_exp = pl.pallas_call(
        kern,
        out_shape=jax.ShapeDtypeStruct((N, Cout, Jout), jnp.float32),
        grid_spec=pltpu.PrefetchScalarGridSpec(
            num_scalar_prefetch=0,
            grid=(N,),  # one sample per step; >=2 parallel steps -> both v7x TCs busy
            in_specs=[
                pl.BlockSpec((None, k * k, Cout, Cin), lambda n: (n, 0, 0, 0)),
                pl.BlockSpec((None, Cin, Lx), lambda n: (n, 0, 0)),
                pl.BlockSpec((None, 1, Jout), lambda n: (n, 0, 0)),
                pl.BlockSpec((Cout, 1), lambda n: (0, 0)),
                pl.BlockSpec(memory_space=pltpu.MemorySpace.SMEM),
            ],
            out_specs=pl.BlockSpec((None, Cout, Jout), lambda n: (n, 0, 0)),
        ),
        compiler_params=pltpu.CompilerParams(
            dimension_semantics=("parallel",),
        ),
    )(w_taps, x_flat, noise_flat, act_bias, noise_strength)

    # Channel-major already -> reshape and drop the (Wp-Wout) garbage columns.
    out = out_exp.reshape(N, Cout, Hout, Wp)[..., :Wout]
    return out


def _reference(x, style, noise, params, *, demodulate=True,
               negative_slope=0.2, act_scale=math.sqrt(2.0), eps=1e-8):
    """Plain-JAX mirror of StyledConv.forward (upsample=False path)."""
    N, Cin, H, W = x.shape
    weight = params["conv_weight"]
    _, Cout, _, k, _ = weight.shape
    if style is not None:
        mod_w = params["mod_weight"]
        mod_scale = 1.0 / math.sqrt(mod_w.shape[1])
        s = style @ (mod_w * mod_scale).T + params["mod_bias"]
    else:
        s = jnp.ones((N, Cin), dtype=x.dtype)
    conv_scale = 1.0 / math.sqrt(Cin * k * k)
    w = conv_scale * weight * s[:, None, :, None, None]
    if demodulate:
        demod = jax.lax.rsqrt(jnp.sum(w * w, axis=(2, 3, 4)) + eps)
        w = w * demod[:, :, None, None, None]

    def conv_one(xi, wi):
        return jax.lax.conv_general_dilated(
            xi[None], wi, window_strides=(1, 1),
            padding=[(k // 2, k // 2)] * 2,
            dimension_numbers=("NCHW", "OIHW", "NCHW"),
            precision=jax.lax.Precision.HIGHEST)[0]

    out = jax.vmap(conv_one)(x, w)                       # (N, Cout, H, W)
    if noise is not None:
        out = out + params["noise_strength"] * noise
    out = out + params["act_bias"].reshape(1, Cout, 1, 1)
    out = jnp.where(out >= 0.0, out, negative_slope * out) * act_scale
    return out


if __name__ == "__main__":
    key = jax.random.PRNGKey(0)
    k_x, k_s, k_n, k_w, k_m, k_b = jax.random.split(key, 6)

    # StyledConv(in_channel=4, out_channel=8, kernel_size=3, style_dim=16)
    N, Cin, Cout, H, W = 2, 4, 8, 16, 16
    ksz, style_dim = 3, 16

    x = jax.random.normal(k_x, (N, Cin, H, W), dtype=jnp.float32)
    style = jax.random.normal(k_s, (N, style_dim), dtype=jnp.float32)
    noise = jax.random.normal(k_n, (N, 1, H, W), dtype=jnp.float32)

    params = {
        "conv_weight": jax.random.normal(k_w, (1, Cout, Cin, ksz, ksz),
                                         dtype=jnp.float32),
        "mod_weight": jax.random.normal(k_m, (Cin, style_dim),
                                        dtype=jnp.float32),
        "mod_bias": jnp.ones((Cin,), dtype=jnp.float32),          # bias_init=1
        # NoiseInjection weight init is 0; use a nonzero value so the path is exercised.
        "noise_strength": jnp.full((1,), 0.1, dtype=jnp.float32),
        "act_bias": 0.1 * jax.random.normal(k_b, (Cout,), dtype=jnp.float32),
    }

    out = jax.jit(styled_conv)(x, style, noise, params)
    out = jax.block_until_ready(out)

    ref = _reference(x, style, noise, params)
    assert out.shape == (N, Cout, H, W), out.shape
    max_err = float(jnp.max(jnp.abs(out - ref)))
    assert max_err < 5e-2, max_err

    print("KERNEL_OK")
</pallas_src>

<mosaic_0001>
module attributes {stable_mosaic.version = 11 : i64} {
  func.func @_styled_conv_kernel(%arg0: i32, %arg1: memref<1x9x8x4xf32, #tpu.memory_space<vmem>>, %arg2: memref<1x4x326xf32, #tpu.memory_space<vmem>>, %arg3: memref<1x1x288xf32, #tpu.memory_space<vmem>>, %arg4: memref<8x1xf32, #tpu.memory_space<vmem>>, %arg5: memref<1x1xf32, #tpu.memory_space<smem>>, %arg6: memref<1x8x288xf32, #tpu.memory_space<vmem>>) attributes {dimension_semantics = [#tpu.dimension_semantics<parallel>], iteration_bounds = array<i64: 2>, scalar_prefetch = 0 : i64, scratch_operands = 0 : i64, tpu.core_type = #tpu.core_type<tc>, window_params = [{transform_indices = @transform_0, window_bounds = array<i64: 1, 9, 8, 4>}, {transform_indices = @transform_1, window_bounds = array<i64: 1, 4, 326>}, {transform_indices = @transform_2, window_bounds = array<i64: 1, 1, 288>}, {pipeline_mode = #tpu.pipeline_mode<synchronous>, transform_indices = @transform_3, window_bounds = array<i64: 8, 1>}, {transform_indices = @transform_4, window_bounds = array<i64: 1, 1>}, {transform_indices = @transform_5, window_bounds = array<i64: 1, 8, 288>}]} {
    %cst = arith.constant 0.000000e+00 : f32
    %0 = vector.broadcast %cst : f32 to vector<8x288xf32>
    %c0 = arith.constant 0 : index
    %c0_0 = arith.constant 0 : index
    %c0_1 = arith.constant 0 : index
    %1 = vector.load %arg2[%c0, %c0_0, %c0_1] : memref<1x4x326xf32, #tpu.memory_space<vmem>>, vector<1x4x288xf32>
    %2 = vector.shape_cast %1 : vector<1x4x288xf32> to vector<4x288xf32>
    %c0_2 = arith.constant 0 : index
    %c0_3 = arith.constant 0 : index
    %c0_4 = arith.constant 0 : index
    %c0_5 = arith.constant 0 : index
    %3 = vector.load %arg1[%c0_2, %c0_3, %c0_4, %c0_5] : memref<1x9x8x4xf32, #tpu.memory_space<vmem>>, vector<1x1x8x4xf32>
    %4 = vector.shape_cast %3 : vector<1x1x8x4xf32> to vector<8x4xf32>
    %cst_6 = arith.constant dense<0.000000e+00> : vector<8x288xf32>
    %5 = tpu.matmul %4, %2, %cst_6 {dimension_numbers = #tpu.dot_dimension_numbers<[1], [0], [0], [1], [0, 0, 1, 1], [], []>} : vector<8x4xf32>, vector<4x288xf32>, vector<8x288xf32> -> vector<8x288xf32>
    %6 = arith.addf %0, %5 : vector<8x288xf32>
    %c0_7 = arith.constant 0 : index
    %c0_8 = arith.constant 0 : index
    %c1 = arith.constant 1 : index
    %7 = vector.load %arg2[%c0_7, %c0_8, %c1] : memref<1x4x326xf32, #tpu.memory_space<vmem>>, vector<1x4x288xf32>
    %8 = vector.shape_cast %7 : vector<1x4x288xf32> to vector<4x288xf32>
    %c0_9 = arith.constant 0 : index
    %c1_10 = arith.constant 1 : index
    %c0_11 = arith.constant 0 : index
    %c0_12 = arith.constant 0 : index
    %9 = vector.load %arg1[%c0_9, %c1_10, %c0_11, %c0_12] : memref<1x9x8x4xf32, #tpu.memory_space<vmem>>, vector<1x1x8x4xf32>
    %10 = vector.shape_cast %9 : vector<1x1x8x4xf32> to vector<8x4xf32>
    %cst_13 = arith.constant dense<0.000000e+00> : vector<8x288xf32>
    %11 = tpu.matmul %10, %8, %cst_13 {dimension_numbers = #tpu.dot_dimension_numbers<[1], [0], [0], [1], [0, 0, 1, 1], [], []>} : vector<8x4xf32>, vector<4x288xf32>, vector<8x288xf32> -> vector<8x288xf32>
    %12 = arith.addf %6, %11 : vector<8x288xf32>
    %c0_14 = arith.constant 0 : index
    %c0_15 = arith.constant 0 : index
    %c2 = arith.constant 2 : index
    %13 = vector.load %arg2[%c0_14, %c0_15, %c2] : memref<1x4x326xf32, #tpu.memory_space<vmem>>, vector<1x4x288xf32>
    %14 = vector.shape_cast %13 : vector<1x4x288xf32> to vector<4x288xf32>
    %c0_16 = arith.constant 0 : index
    %c2_17 = arith.constant 2 : index
    %c0_18 = arith.constant 0 : index
    %c0_19 = arith.constant 0 : index
    %15 = vector.load %arg1[%c0_16, %c2_17, %c0_18, %c0_19] : memref<1x9x8x4xf32, #tpu.memory_space<vmem>>, vector<1x1x8x4xf32>
    %16 = vector.shape_cast %15 : vector<1x1x8x4xf32> to vector<8x4xf32>
    %cst_20 = arith.constant dense<0.000000e+00> : vector<8x288xf32>
    %17 = tpu.matmul %16, %14, %cst_20 {dimension_numbers = #tpu.dot_dimension_numbers<[1], [0], [0], [1], [0, 0, 1, 1], [], []>} : vector<8x4xf32>, vector<4x288xf32>, vector<8x288xf32> -> vector<8x288xf32>
    %18 = arith.addf %12, %17 : vector<8x288xf32>
    %c0_21 = arith.constant 0 : index
    %c0_22 = arith.constant 0 : index
    %c18 = arith.constant 18 : index
    %19 = vector.load %arg2[%c0_21, %c0_22, %c18] : memref<1x4x326xf32, #tpu.memory_space<vmem>>, vector<1x4x288xf32>
    %20 = vector.shape_cast %19 : vector<1x4x288xf32> to vector<4x288xf32>
    %c0_23 = arith.constant 0 : index
    %c3 = arith.constant 3 : index
    %c0_24 = arith.constant 0 : index
    %c0_25 = arith.constant 0 : index
    %21 = vector.load %arg1[%c0_23, %c3, %c0_24, %c0_25] : memref<1x9x8x4xf32, #tpu.memory_space<vmem>>, vector<1x1x8x4xf32>
    %22 = vector.shape_cast %21 : vector<1x1x8x4xf32> to vector<8x4xf32>
    %cst_26 = arith.constant dense<0.000000e+00> : vector<8x288xf32>
    %23 = tpu.matmul %22, %20, %cst_26 {dimension_numbers = #tpu.dot_dimension_numbers<[1], [0], [0], [1], [0, 0, 1, 1], [], []>} : vector<8x4xf32>, vector<4x288xf32>, vector<8x288xf32> -> vector<8x288xf32>
    %24 = arith.addf %18, %23 : vector<8x288xf32>
    %c0_27 = arith.constant 0 : index
    %c0_28 = arith.constant 0 : index
    %c19 = arith.constant 19 : index
    %25 = vector.load %arg2[%c0_27, %c0_28, %c19] : memref<1x4x326xf32, #tpu.memory_space<vmem>>, vector<1x4x288xf32>
    %26 = vector.shape_cast %25 : vector<1x4x288xf32> to vector<4x288xf32>
    %c0_29 = arith.constant 0 : index
    %c4 = arith.constant 4 : index
    %c0_30 = arith.constant 0 : index
    %c0_31 = arith.constant 0 : index
    %27 = vector.load %arg1[%c0_29, %c4, %c0_30, %c0_31] : memref<1x9x8x4xf32, #tpu.memory_space<vmem>>, vector<1x1x8x4xf32>
    %28 = vector.shape_cast %27 : vector<1x1x8x4xf32> to vector<8x4xf32>
    %cst_32 = arith.constant dense<0.000000e+00> : vector<8x288xf32>
    %29 = tpu.matmul %28, %26, %cst_32 {dimension_numbers = #tpu.dot_dimension_numbers<[1], [0], [0], [1], [0, 0, 1, 1], [], []>} : vector<8x4xf32>, vector<4x288xf32>, vector<8x288xf32> -> vector<8x288xf32>
    %30 = arith.addf %24, %29 : vector<8x288xf32>
    %c0_33 = arith.constant 0 : index
    %c0_34 = arith.constant 0 : index
    %c20 = arith.constant 20 : index
    %31 = vector.load %arg2[%c0_33, %c0_34, %c20] : memref<1x4x326xf32, #tpu.memory_space<vmem>>, vector<1x4x288xf32>
    %32 = vector.shape_cast %31 : vector<1x4x288xf32> to vector<4x288xf32>
    %c0_35 = arith.constant 0 : index
    %c5 = arith.constant 5 : index
    %c0_36 = arith.constant 0 : index
    %c0_37 = arith.constant 0 : index
    %33 = vector.load %arg1[%c0_35, %c5, %c0_36, %c0_37] : memref<1x9x8x4xf32, #tpu.memory_space<vmem>>, vector<1x1x8x4xf32>
    %34 = vector.shape_cast %33 : vector<1x1x8x4xf32> to vector<8x4xf32>
    %cst_38 = arith.constant dense<0.000000e+00> : vector<8x288xf32>
    %35 = tpu.matmul %34, %32, %cst_38 {dimension_numbers = #tpu.dot_dimension_numbers<[1], [0], [0], [1], [0, 0, 1, 1], [], []>} : vector<8x4xf32>, vector<4x288xf32>, vector<8x288xf32> -> vector<8x288xf32>
    %36 = arith.addf %30, %35 : vector<8x288xf32>
    %c0_39 = arith.constant 0 : index
    %c0_40 = arith.constant 0 : index
    %c36 = arith.constant 36 : index
    %37 = vector.load %arg2[%c0_39, %c0_40, %c36] : memref<1x4x326xf32, #tpu.memory_space<vmem>>, vector<1x4x288xf32>
    %38 = vector.shape_cast %37 : vector<1x4x288xf32> to vector<4x288xf32>
    %c0_41 = arith.constant 0 : index
    %c6 = arith.constant 6 : index
    %c0_42 = arith.constant 0 : index
    %c0_43 = arith.constant 0 : index
    %39 = vector.load %arg1[%c0_41, %c6, %c0_42, %c0_43] : memref<1x9x8x4xf32, #tpu.memory_space<vmem>>, vector<1x1x8x4xf32>
    %40 = vector.shape_cast %39 : vector<1x1x8x4xf32> to vector<8x4xf32>
    %cst_44 = arith.constant dense<0.000000e+00> : vector<8x288xf32>
    %41 = tpu.matmul %40, %38, %cst_44 {dimension_numbers = #tpu.dot_dimension_numbers<[1], [0], [0], [1], [0, 0, 1, 1], [], []>} : vector<8x4xf32>, vector<4x288xf32>, vector<8x288xf32> -> vector<8x288xf32>
    %42 = arith.addf %36, %41 : vector<8x288xf32>
    %c0_45 = arith.constant 0 : index
    %c0_46 = arith.constant 0 : index
    %c37 = arith.constant 37 : index
    %43 = vector.load %arg2[%c0_45, %c0_46, %c37] : memref<1x4x326xf32, #tpu.memory_space<vmem>>, vector<1x4x288xf32>
    %44 = vector.shape_cast %43 : vector<1x4x288xf32> to vector<4x288xf32>
    %c0_47 = arith.constant 0 : index
    %c7 = arith.constant 7 : index
    %c0_48 = arith.constant 0 : index
    %c0_49 = arith.constant 0 : index
    %45 = vector.load %arg1[%c0_47, %c7, %c0_48, %c0_49] : memref<1x9x8x4xf32, #tpu.memory_space<vmem>>, vector<1x1x8x4xf32>
    %46 = vector.shape_cast %45 : vector<1x1x8x4xf32> to vector<8x4xf32>
    %cst_50 = arith.constant dense<0.000000e+00> : vector<8x288xf32>
    %47 = tpu.matmul %46, %44, %cst_50 {dimension_numbers = #tpu.dot_dimension_numbers<[1], [0], [0], [1], [0, 0, 1, 1], [], []>} : vector<8x4xf32>, vector<4x288xf32>, vector<8x288xf32> -> vector<8x288xf32>
    %48 = arith.addf %42, %47 : vector<8x288xf32>
    %c0_51 = arith.constant 0 : index
    %c0_52 = arith.constant 0 : index
    %c38 = arith.constant 38 : index
    %49 = vector.load %arg2[%c0_51, %c0_52, %c38] : memref<1x4x326xf32, #tpu.memory_space<vmem>>, vector<1x4x288xf32>
    %50 = vector.shape_cast %49 : vector<1x4x288xf32> to vector<4x288xf32>
    %c0_53 = arith.constant 0 : index
    %c8 = arith.constant 8 : index
    %c0_54 = arith.constant 0 : index
    %c0_55 = arith.constant 0 : index
    %51 = vector.load %arg1[%c0_53, %c8, %c0_54, %c0_55] : memref<1x9x8x4xf32, #tpu.memory_space<vmem>>, vector<1x1x8x4xf32>
    %52 = vector.shape_cast %51 : vector<1x1x8x4xf32> to vector<8x4xf32>
    %cst_56 = arith.constant dense<0.000000e+00> : vector<8x288xf32>
    %53 = tpu.matmul %52, %50, %cst_56 {dimension_numbers = #tpu.dot_dimension_numbers<[1], [0], [0], [1], [0, 0, 1, 1], [], []>} : vector<8x4xf32>, vector<4x288xf32>, vector<8x288xf32> -> vector<8x288xf32>
    %54 = arith.addf %48, %53 : vector<8x288xf32>
    %c0_57 = arith.constant 0 : index
    %c0_58 = arith.constant 0 : index
    %55 = memref.load %arg5[%c0_57, %c0_58] : memref<1x1xf32, #tpu.memory_space<smem>>
    %c0_59 = arith.constant 0 : index
    %c0_60 = arith.constant 0 : index
    %c0_61 = arith.constant 0 : index
    %56 = vector.load %arg3[%c0_59, %c0_60, %c0_61] : memref<1x1x288xf32, #tpu.memory_space<vmem>>, vector<1x1x288xf32>
    %57 = vector.shape_cast %56 : vector<1x1x288xf32> to vector<1x288xf32>
    %58 = vector.broadcast %55 : f32 to vector<1x288xf32>
    %59 = arith.mulf %58, %57 : vector<1x288xf32>
    %60 = vector.broadcast %59 : vector<1x288xf32> to vector<8x288xf32>
    %61 = arith.addf %54, %60 : vector<8x288xf32>
    %c0_62 = arith.constant 0 : index
    %c0_63 = arith.constant 0 : index
    %62 = vector.load %arg4[%c0_62, %c0_63] : memref<8x1xf32, #tpu.memory_space<vmem>>, vector<8x1xf32>
    %63 = vector.broadcast %62 : vector<8x1xf32> to vector<8x288xf32>
    %64 = arith.addf %61, %63 : vector<8x288xf32>
    %cst_64 = arith.constant 0.000000e+00 : f32
    %65 = vector.broadcast %cst_64 : f32 to vector<8x288xf32>
    %66 = arith.cmpf oge, %64, %65 : vector<8x288xf32>
    %cst_65 = arith.constant 2.000000e-01 : f32
    %67 = vector.broadcast %cst_65 : f32 to vector<8x288xf32>
    %68 = arith.mulf %67, %64 : vector<8x288xf32>
    %69 = arith.select %66, %64, %68 : vector<8x288xi1>, vector<8x288xf32>
    %cst_66 = arith.constant 1.41421354 : f32
    %70 = vector.broadcast %cst_66 : f32 to vector<8x288xf32>
    %71 = arith.mulf %69, %70 : vector<8x288xf32>
    %c0_67 = arith.constant 0 : index
    %c0_68 = arith.constant 0 : index
    %c0_69 = arith.constant 0 : index
    %72 = vector.load %arg6[%c0_67, %c0_68, %c0_69] : memref<1x8x288xf32, #tpu.memory_space<vmem>>, vector<1x8x288xf32>
    %73 = vector.shape_cast %72 : vector<1x8x288xf32> to vector<8x288xf32>
    %74 = vector.shape_cast %71 : vector<8x288xf32> to vector<1x8x288xf32>
    tpu.vector_store %arg6[%c0_67, %c0_68, %c0_69], %74 {strides = array<i32>} : memref<1x8x288xf32, #tpu.memory_space<vmem>>, vector<1x8x288xf32>,
    return
  }
  func.func @transform_0(%arg0: i32) -> (i32, i32, i32, i32) {
    %c0_i32 = arith.constant 0 : i32
    %c0_i32_0 = arith.constant 0 : i32
    %c0_i32_1 = arith.constant 0 : i32
    %c0_i32_2 = arith.constant 0 : i32
    return %arg0, %c0_i32, %c0_i32_0, %c0_i32_1 : i32, i32, i32, i32
  }
  func.func @transform_1(%arg0: i32) -> (i32, i32, i32) {
    %c0_i32 = arith.constant 0 : i32
    %c0_i32_0 = arith.constant 0 : i32
    %c0_i32_1 = arith.constant 0 : i32
    return %arg0, %c0_i32, %c0_i32_0 : i32, i32, i32
  }
  func.func @transform_2(%arg0: i32) -> (i32, i32, i32) {
    %c0_i32 = arith.constant 0 : i32
    %c0_i32_0 = arith.constant 0 : i32
    %c0_i32_1 = arith.constant 0 : i32
    return %arg0, %c0_i32, %c0_i32_0 : i32, i32, i32
  }
  func.func @transform_3(%arg0: i32) -> (i32, i32) {
    %c0_i32 = arith.constant 0 : i32
    %c0_i32_0 = arith.constant 0 : i32
    %c0_i32_1 = arith.constant 0 : i32
    return %c0_i32, %c0_i32_0 : i32, i32
  }
  func.func @transform_4(%arg0: i32) -> (i32, i32) {
    %c0_i32 = arith.constant 0 : i32
    %c0_i32_0 = arith.constant 0 : i32
    %c0_i32_1 = arith.constant 0 : i32
    return %c0_i32, %c0_i32_0 : i32, i32
  }
  func.func @transform_5(%arg0: i32) -> (i32, i32, i32) {
    %c0_i32 = arith.constant 0 : i32
    %c0_i32_0 = arith.constant 0 : i32
    %c0_i32_1 = arith.constant 0 : i32
    return %arg0, %c0_i32, %c0_i32_0 : i32, i32, i32
  }
}

</mosaic_0001>

<llo_original>
// kernel: styled_conv.1
$region0: #{styled_conv.1}
  #allocation0 [shape = 'u32[]', space=smem, size = 0x4, offset = 0x4, fixed_abs, tag = 'smem constant byte address 0x4 - core index']
  #allocation1 [shape = 'u32[72,128]{1,0:T(1,128)}', space=vmem, size = 0x9000, scoped, tag = 'internal scratch']
  #allocation2 [shape = 'f32[1,1]{1,0:T(1,128)S(6)}', space=smem, size = 0x200, scoped, tag = 'scoped memory for styled_conv.1']
  %s0 = inlined_call_operand.vmem [shape: f32[2,9,8,4], index: 0, kind: input, shape index: {}]
  %s1 = inlined_call_operand.vmem [shape: f32[2,4,326], index: 1, kind: input, shape index: {}]
  %s2 = inlined_call_operand.vmem [shape: f32[2,1,288], index: 2, kind: input, shape index: {}]
  %s3 = inlined_call_operand.vmem [shape: f32[8,1], index: 3, kind: input, shape index: {}]
  %s4 = inlined_call_operand.<no memory space> [shape: f32[1,1], index: 4, kind: input, shape index: {}]
  %s5 = inlined_call_operand.vmem [shape: f32[2,8,288], index: 5, kind: output, shape index: {}]
  %s6 = sld [smem:[#allocation0]]
  $region53: #{styled_conv.1} parent=0
    _
  %s8 = ssub.s32 1, %s6
  %s9 = scalar_select 0, %s8, %s6
  %10 = sst [smem:[#allocation2]] %s4
  loop: start=0, step=1, limit=4
  $region2: #{styled_conv.1} parent=0 // loop_pre_header
    _
  $region3: #{styled_conv.1} parent=0 // loop_header
    %s12 = sphi 0, %s16
    %p13 = scmp.ge.s32.totalorder %s12, 4
    %s22 = sphi 0, %s24
    %s25 = sphi 0, %s22
    %s26 = sphi 0, %s25
    %s42 = sphi 0, %s26
    %s48 = sphi 0, %s50
    %s51 = sphi 0, %s48
    %s52 = sphi 0, %s51
    %s68 = sphi 0, %s52
    %s74 = sphi 0, %s76
    %s77 = sphi 0, %s74
    %s78 = sphi 0, %s77
    %s94 = sphi 0, %s78
    %s98 = sphi 0, %s98
    %s100 = sphi 0, %s98
    %s101 = sphi 0, %s100
    %s115 = sphi 0, %s101
    %s119 = sphi 0, %s119
    %s121 = sphi 0, %s119
    %s122 = sphi 0, %s121
    %s136 = sphi 0, %s122
    %s142 = sphi 0, %s144
    %s145 = sphi 0, %s142
    %s146 = sphi 0, %s145
    %s162 = sphi 0, %s146
  $region4: #{styled_conv.1} parent=0 // loop_header_branch
    %15 = sbr.rel (%p13) target = $region8
  $region5: #{styled_conv.1} parent=0 // loop_body
    %s17 = ssub.s32 %s12, 1
    %s18 = ssub.s32 %s12, 2
    %s19 = sadd.s32 %s12, 1
    %s20 = ssub.s32 %s12, %s19
    %p21 = scmp.eq.s32.totalorder %s20, 0
    %s23 = sadd.s32 %s22, 1
    %s24 = scalar_select %p21, %s22, %s23
    %p27 = pneg %p21
    %p28 = scmp.eq.s32.totalorder %s12, 1
    %p29 = por %p27, %p28
    %p30 = scmp.ne.s32.totalorder %s22, %s25
    %p31 = scmp.eq.s32.totalorder %s12, 0
    %p32 = por %p30, %p31
    %p33 = scmp.ne.s32.totalorder %s22, %s25
    %p34 = scmp.eq.s32.totalorder %s17, 1
    %p35 = por %p33, %p34
    %p36 = scmp.ne.s32.totalorder %s25, %s26
    %p37 = scmp.eq.s32.totalorder %s17, 0
    %p38 = por %p36, %p37
    %p39 = scmp.ne.s32.totalorder %s25, %s26
    %p40 = scmp.eq.s32.totalorder %s18, 1
    %p41 = por %p39, %p40
    %p43 = scmp.ne.s32.totalorder %s26, %s42
    %p44 = scmp.eq.s32.totalorder %s18, 0
    %p45 = por %p43, %p44
    %s46 = ssub.s32 %s12, %s19
    %p47 = scmp.eq.s32.totalorder %s46, 0
    %s49 = sadd.s32 %s48, 1
    %s50 = scalar_select %p47, %s48, %s49
    %p53 = pneg %p47
    %p54 = scmp.eq.s32.totalorder %s12, 1
    %p55 = por %p53, %p54
    %p56 = scmp.ne.s32.totalorder %s48, %s51
    %p57 = scmp.eq.s32.totalorder %s12, 0
    %p58 = por %p56, %p57
    %p59 = scmp.ne.s32.totalorder %s48, %s51
    %p60 = scmp.eq.s32.totalorder %s17, 1
    %p61 = por %p59, %p60
    %p62 = scmp.ne.s32.totalorder %s51, %s52
    %p63 = scmp.eq.s32.totalorder %s17, 0
    %p64 = por %p62, %p63
    %p65 = scmp.ne.s32.totalorder %s51, %s52
    %p66 = scmp.eq.s32.totalorder %s18, 1
    %p67 = por %p65, %p66
    %p69 = scmp.ne.s32.totalorder %s52, %s68
    %p70 = scmp.eq.s32.totalorder %s18, 0
    %p71 = por %p69, %p70
    %s72 = ssub.s32 %s12, %s19
    %p73 = scmp.eq.s32.totalorder %s72, 0
    %s75 = sadd.s32 %s74, 1
    %s76 = scalar_select %p73, %s74, %s75
    %p79 = pneg %p73
    %p80 = scmp.eq.s32.totalorder %s12, 1
    %p81 = por %p79, %p80
    %p82 = scmp.ne.s32.totalorder %s74, %s77
    %p83 = scmp.eq.s32.totalorder %s12, 0
    %p84 = por %p82, %p83
    %p85 = scmp.ne.s32.totalorder %s74, %s77
    %p86 = scmp.eq.s32.totalorder %s17, 1
    %p87 = por %p85, %p86
    %p88 = scmp.ne.s32.totalorder %s77, %s78
    %p89 = scmp.eq.s32.totalorder %s17, 0
    %p90 = por %p88, %p89
    %p91 = scmp.ne.s32.totalorder %s77, %s78
    %p92 = scmp.eq.s32.totalorder %s18, 1
    %p93 = por %p91, %p92
    %p95 = scmp.ne.s32.totalorder %s78, %s94
    %p96 = scmp.eq.s32.totalorder %s18, 0
    %p97 = por %p95, %p96
    %s99 = sadd.s32 %s98, 1
    %p102 = scmp.eq.s32.totalorder %s12, 1
    %p103 = scmp.ne.s32.totalorder %s98, %s100
    %p104 = scmp.eq.s32.totalorder %s12, 0
    %p105 = por %p103, %p104
    %p106 = scmp.ne.s32.totalorder %s98, %s100
    %p107 = scmp.eq.s32.totalorder %s17, 1
    %p108 = por %p106, %p107
    %p109 = scmp.ne.s32.totalorder %s100, %s101
    %p110 = scmp.eq.s32.totalorder %s17, 0
    %p111 = por %p109, %p110
    %p112 = scmp.ne.s32.totalorder %s100, %s101
    %p113 = scmp.eq.s32.totalorder %s18, 1
    %p114 = por %p112, %p113
    %p116 = scmp.ne.s32.totalorder %s101, %s115
    %p117 = scmp.eq.s32.totalorder %s18, 0
    %p118 = por %p116, %p117
    %s120 = sadd.s32 %s119, 1
    %p123 = scmp.eq.s32.totalorder %s12, 1
    %p124 = scmp.ne.s32.totalorder %s119, %s121
    %p125 = scmp.eq.s32.totalorder %s12, 0
    %p126 = por %p124, %p125
    %p127 = scmp.ne.s32.totalorder %s119, %s121
    %p128 = scmp.eq.s32.totalorder %s17, 1
    %p129 = por %p127, %p128
    %p130 = scmp.ne.s32.totalorder %s121, %s122
    %p131 = scmp.eq.s32.totalorder %s17, 0
    %p132 = por %p130, %p131
    %p133 = scmp.ne.s32.totalorder %s121, %s122
    %p134 = scmp.eq.s32.totalorder %s18, 1
    %p135 = por %p133, %p134
    %p137 = scmp.ne.s32.totalorder %s122, %s136
    %p138 = scmp.eq.s32.totalorder %s18, 0
    %p139 = por %p137, %p138
    %s140 = ssub.s32 %s12, %s19
    %p141 = scmp.eq.s32.totalorder %s140, 0
    %s143 = sadd.s32 %s142, 1
    %s144 = scalar_select %p141, %s142, %s143
    %p147 = pneg %p141
    %p148 = scmp.eq.s32.totalorder %s12, 1
    %p149 = por %p147, %p148
    %p150 = scmp.ne.s32.totalorder %s142, %s145
    %p151 = scmp.eq.s32.totalorder %s12, 0
    %p152 = por %p150, %p151
    %p153 = scmp.ne.s32.totalorder %s142, %s145
    %p154 = scmp.eq.s32.totalorder %s17, 1
    %p155 = por %p153, %p154
    %p156 = scmp.ne.s32.totalorder %s145, %s146
    %p157 = scmp.eq.s32.totalorder %s17, 0
    %p158 = por %p156, %p157
    %p159 = scmp.ne.s32.totalorder %s145, %s146
    %p160 = scmp.eq.s32.totalorder %s18, 1
    %p161 = por %p159, %p160
    %p163 = scmp.ne.s32.totalorder %s146, %s162
    %p164 = scmp.eq.s32.totalorder %s18, 0
    %p165 = por %p163, %p164
    %p166 = scmp.le.s32.totalorder 1, %s12
    %p167 = scmp.lt.s32.totalorder %s12, 3
    %p168 = pnand %p166, %p167
    %p169 = pneg %p168
    // Predicated region
    $region9: #{styled_conv.1} parent=5 // pred_check
      _
    $region10: #{styled_conv.1} parent=5 // pred_check_branch
      %171 = sbr.rel (%p168) target = $region12
    $region11: #{styled_conv.1} parent=5 // pred_region
      %s172 = ssub.s32 %s12, 1
      // Predicated region
      $region13: #{styled_conv.1} parent=11 // pred_check
        %p173 = pneg %p111
      $region14: #{styled_conv.1} parent=11 // pred_check_branch
        %175 = sbr.rel (%p173) target = $region16
      $region15: #{styled_conv.1} parent=11 // pred_region
        _
      $region16: #{styled_conv.1} parent=11 // pred_fallthru
        _
      // Predicated region
      $region17: #{styled_conv.1} parent=11 // pred_check
        %p176 = pneg %p132
      $region18: #{styled_conv.1} parent=11 // pred_check_branch
        %178 = sbr.rel (%p176) target = $region20
      $region19: #{styled_conv.1} parent=11 // pred_region
        _
      $region20: #{styled_conv.1} parent=11 // pred_fallthru
        _
    $region12: #{styled_conv.1} parent=5 // pred_fallthru
      _
    %p179 = scmp.lt.s32.totalorder %s12, 2
    // Predicated region
    $region21: #{styled_conv.1} parent=5 // pred_check
      %p180 = pneg %p179
    $region22: #{styled_conv.1} parent=5 // pred_check_branch
      %182 = sbr.rel (%p180) target = $region24
    $region23: #{styled_conv.1} parent=5 // pred_region
      // Predicated region
      $region25: #{styled_conv.1} parent=23 // pred_check
        %p183 = pneg %p32
      $region26: #{styled_conv.1} parent=23 // pred_check_branch
        %185 = sbr.rel (%p183) target = $region28
      $region27: #{styled_conv.1} parent=23 // pred_region
        %p186 = scmp.lt.s32.totalorder %s12, 1
        %s187 = scalar_select %p186, %s12, 1
        %s188 = smul.addr %s187, 9
        %s189 = smul.addr %s188, 8
        %s190 = scalar_lea.vmem %s0, %s189
      $region28: #{styled_conv.1} parent=23 // pred_fallthru
        _
      // Predicated region
      $region29: #{styled_conv.1} parent=23 // pred_check
        %p191 = pneg %p58
      $region30: #{styled_conv.1} parent=23 // pred_check_branch
        %193 = sbr.rel (%p191) target = $region32
      $region31: #{styled_conv.1} parent=23 // pred_region
        %p194 = scmp.lt.s32.totalorder %s12, 1
        %s195 = scalar_select %p194, %s12, 1
        %s196 = smul.addr %s195, 3
        %s197 = smul.addr %s196, 4
        %s198 = scalar_lea.vmem %s1, %s197
      $region32: #{styled_conv.1} parent=23 // pred_fallthru
        _
      // Predicated region
      $region33: #{styled_conv.1} parent=23 // pred_check
        %p199 = pneg %p84
      $region34: #{styled_conv.1} parent=23 // pred_check_branch
        %201 = sbr.rel (%p199) target = $region36
      $region35: #{styled_conv.1} parent=23 // pred_region
        %p202 = scmp.lt.s32.totalorder %s12, 1
        %s203 = scalar_select %p202, %s12, 1
        %s204 = smul.addr %s203, 3
        %s205 = scalar_lea.vmem %s2, %s204
      $region36: #{styled_conv.1} parent=23 // pred_fallthru
        _
    $region24: #{styled_conv.1} parent=5 // pred_fallthru
      _
    %p206 = scmp.le.s32.totalorder 1, %s12
    %p207 = scmp.lt.s32.totalorder %s12, 3
    %p208 = pnand %p206, %p207
    %p209 = pneg %p208
    // Predicated region
    $region37: #{styled_conv.1} parent=5 // pred_check
      _
    $region38: #{styled_conv.1} parent=5 // pred_check_branch
      %211 = sbr.rel (%p208) target = $region40
    $region39: #{styled_conv.1} parent=5 // pred_region
      %s212 = ssub.s32 %s12, 1
      %p213 = scmp.lt.s32.totalorder %s17, 1
      %s214 = scalar_select %p213, %s17, 1
      %s215 = smul.addr %s214, 9
      %s216 = smul.addr %s215, 8
      %s217 = scalar_lea.vmem %s0, %s216
      %p218 = pneg %p38
      %p219 = pneg %p35
      %p220 = scmp.lt.s32.totalorder %s17, 1
      %s221 = scalar_select %p220, %s17, 1
      %s222 = smul.addr %s221, 3
      %s223 = smul.addr %s222, 4
      %s224 = scalar_lea.vmem %s1, %s223
      %p225 = pneg %p64
      %p226 = pneg %p61
      %p227 = scmp.lt.s32.totalorder %s17, 1
      %s228 = scalar_select %p227, %s17, 1
      %s229 = smul.addr %s228, 3
      %s230 = scalar_lea.vmem %s2, %s229
      %p231 = pneg %p90
      %p232 = pneg %p87
      %p233 = pneg %p111
      %p234 = pneg %p108
      %p235 = pneg %p132
      %p236 = pneg %p129
      %p237 = pneg %p158
      %p238 = pneg %p155
      %p239 = scmp.lt.s32.totalorder %s17, 1
      %s240 = scalar_select %p239, %s17, 1
      %s241 = smul.addr %s240, 3
      %s242 = smul.addr %s241, 8
      %s243 = scalar_lea.vmem %s5, %s242
      %p244 = scmp.lt.s32.totalorder %s17, 1
      %s245 = scalar_select %p244, %s17, 1
      %s246 = smul.addr %s245, 9
      %s247 = smul.addr %s246, 8
      %s248 = scalar_lea.vmem %s0, %s247
      %p249 = scmp.lt.s32.totalorder %s17, 1
      %s250 = scalar_select %p249, %s17, 1
      %s251 = smul.addr %s250, 3
      %s252 = smul.addr %s251, 4
      %s253 = scalar_lea.vmem %s1, %s252
      %p254 = scmp.lt.s32.totalorder %s17, 1
      %s255 = scalar_select %p254, %s17, 1
      %s256 = smul.addr %s255, 3
      %s257 = scalar_lea.vmem %s2, %s256
      %p258 = scmp.lt.s32.totalorder %s17, 1
      %s259 = scalar_select %p258, %s17, 1
      %s260 = smul.addr %s259, 3
      %s261 = smul.addr %s260, 8
      %s262 = scalar_lea.vmem %s5, %s261
      %v263 = vld [vmem:[%s253] sm:$0xff]
      %v264 = vld [vmem:[%s253 + $0x8] sm:$0xf]
      %v265 = vld [vmem:[%s248] sm:$0xff]
      %s266 = scalar_lea.vmem %s248, 8
      %v267 = vld [vmem:[%s266] sm:$0xff]
      %270 = vst [vmem:[#allocation1] ss:$2 sm:$0xff] %v263
      %s271 = scalar_lea.vmem [#allocation1], 16
      %272 = vst [vmem:[%s271] ss:$2 sm:$0xff] %v264
      %v273 = vld.sshfl [vmem:[#allocation1] sm:$0xff pattern:$0x75316420]
      %v274 = vld.sshfl [vmem:[#allocation1 + $0x8] sm:$0xff pattern:$0x75316420]
      %v275 = vld.sshfl [vmem:[#allocation1 + $0x10] sm:$0xff pattern:$0x75316420]
      %276 = vrot.lane.b32.xlu0 %v273, 127
      %v277 = vpop.permute.xlu0 %276
      %278 = vrot.lane.b32.xlu0 %v274, 127
      %v279 = vpop.permute.xlu0 %278
      %280 = vrot.lane.b32.xlu0 %v275, 127
      %v281 = vpop.permute.xlu0 %280
      %vm282 = vcmask 1039360
      %v283 = vsel %vm282, %v277, %v279
      %v284 = vsel %vm282, %v279, %v281
      %vm285 = vcmask 31744
      %v287 = vsel %vm285, %v267, 0
      %vm289 = vcmask 1043456
      %v290 = vsel %vm289, %v283, 0
      %v292 = vsel %vm289, %v284, 0
      %v294 = vsel %vm289, %v281, 0
      %296 = vmatpush.msra.mxu0 0.0
      %297 = vmatpush.msra.mxu0 0.0
      %298 = vmatpush.msra.mxu0 0.0
      %299 = vmatpush.msra.mxu0 0.0
      %300 = vmatpush.msra.mxu0 0.0
      %301 = vmatpush.msra.mxu0 0.0
      %302 = vmatpush.msra.mxu0 0.0
      %303 = vmatpush.msra.mxu0 0.0
      %304 = vmatpush.msra.mxu0 0.0
      %305 = vmatpush.msra.mxu0 0.0
      %306 = vmatpush.msra.mxu0 0.0
      %307 = vmatpush.msra.mxu0 0.0
      %308 = vmatpush.msra.mxu0 0.0
      %309 = vmatpush.msra.mxu0 0.0
      %310 = vmatpush.msra.mxu0 0.0
      %311 = vmatpush.msra.mxu0 %v290
      %312 = vmatmul.f32.gmra.mxu0 %v287
      %v313 = vpop.f32.mrf.mxu0
      %v314 = vadd.f32 0.0, %v313
      %315 = vdwg.mxu0
      %316 = vmatpush.msra.mxu0 0.0
      %317 = vmatpush.msra.mxu0 0.0
      %318 = vmatpush.msra.mxu0 0.0
      %319 = vmatpush.msra.mxu0 0.0
      %320 = vmatpush.msra.mxu0 0.0
      %321 = vmatpush.msra.mxu0 0.0
      %322 = vmatpush.msra.mxu0 0.0
      %323 = vmatpush.msra.mxu0 0.0
      %324 = vmatpush.msra.mxu0 0.0
      %325 = vmatpush.msra.mxu0 0.0
      %326 = vmatpush.msra.mxu0 0.0
      %327 = vmatpush.msra.mxu0 0.0
      %328 = vmatpush.msra.mxu0 0.0
      %329 = vmatpush.msra.mxu0 0.0
      %330 = vmatpush.msra.mxu0 0.0
      %331 = vmatpush.msra.mxu0 %v292
      %332 = vmatmul.f32.gmra.mxu0 %v287
      %v333 = vpop.f32.mrf.mxu0
      %v334 = vadd.f32 0.0, %v333
      %335 = vdwg.mxu0
      %336 = vmatpush.msra.mxu0 0.0
      %337 = vmatpush.msra.mxu0 0.0
      %338 = vmatpush.msra.mxu0 0.0
      %339 = vmatpush.msra.mxu0 0.0
      %340 = vmatpush.msra.mxu0 0.0
      %341 = vmatpush.msra.mxu0 0.0
      %342 = vmatpush.msra.mxu0 0.0
      %343 = vmatpush.msra.mxu0 0.0
      %344 = vmatpush.msra.mxu0 0.0
      %345 = vmatpush.msra.mxu0 0.0
      %346 = vmatpush.msra.mxu0 0.0
      %347 = vmatpush.msra.mxu0 0.0
      %348 = vmatpush.msra.mxu0 0.0
      %349 = vmatpush.msra.mxu0 0.0
      %350 = vmatpush.msra.mxu0 0.0
      %351 = vmatpush.msra.mxu0 %v294
      %352 = vmatmul.f32.gmra.mxu0 %v287
      %v353 = vpop.f32.mrf.mxu0
      %v354 = vadd.f32 0.0, %v353
      %355 = vdwg.mxu0
      %356 = vst [vmem:[#allocation1] ss:$2 sm:$0xff] %v263
      %s357 = scalar_lea.vmem [#allocation1], 16
      %358 = vst [vmem:[%s357] ss:$2 sm:$0xff] %v264
      %v359 = vld.sshfl [vmem:[#allocation1] sm:$0xff pattern:$0x75316420]
      %v360 = vld.sshfl [vmem:[#allocation1 + $0x8] sm:$0xff pattern:$0x75316420]
      %v361 = vld.sshfl [vmem:[#allocation1 + $0x10] sm:$0xff pattern:$0x75316420]
      %v363 = vsel %vm285, %v265, 0
      %v365 = vsel %vm289, %v359, 0
      %v367 = vsel %vm289, %v360, 0
      %v369 = vsel %vm289, %v361, 0
      %371 = vmatpush.msra.mxu0 0.0
      %372 = vmatpush.msra.mxu0 0.0
      %373 = vmatpush.msra.mxu0 0.0
      %374 = vmatpush.msra.mxu0 0.0
      %375 = vmatpush.msra.mxu0 0.0
      %376 = vmatpush.msra.mxu0 0.0
      %377 = vmatpush.msra.mxu0 0.0
      %378 = vmatpush.msra.mxu0 0.0
      %379 = vmatpush.msra.mxu0 0.0
      %380 = vmatpush.msra.mxu0 0.0
      %381 = vmatpush.msra.mxu0 0.0
      %382 = vmatpush.msra.mxu0 0.0
      %383 = vmatpush.msra.mxu0 0.0
      %384 = vmatpush.msra.mxu0 0.0
      %385 = vmatpush.msra.mxu0 0.0
      %386 = vmatpush.msra.mxu0 %v365
      %387 = vmatmul.f32.gmra.mxu0 %v363
      %v388 = vpop.f32.mrf.mxu0
      %v389 = vadd.f32 %v314, %v388
      %390 = vdwg.mxu0
      %391 = vmatpush.msra.mxu0 0.0
      %392 = vmatpush.msra.mxu0 0.0
      %393 = vmatpush.msra.mxu0 0.0
      %394 = vmatpush.msra.mxu0 0.0
      %395 = vmatpush.msra.mxu0 0.0
      %396 = vmatpush.msra.mxu0 0.0
      %397 = vmatpush.msra.mxu0 0.0
      %398 = vmatpush.msra.mxu0 0.0
      %399 = vmatpush.msra.mxu0 0.0
      %400 = vmatpush.msra.mxu0 0.0
      %401 = vmatpush.msra.mxu0 0.0
      %402 = vmatpush.msra.mxu0 0.0
      %403 = vmatpush.msra.mxu0 0.0
      %404 = vmatpush.msra.mxu0 0.0
      %405 = vmatpush.msra.mxu0 0.0
      %406 = vmatpush.msra.mxu0 %v367
      %407 = vmatmul.f32.gmra.mxu0 %v363
      %v408 = vpop.f32.mrf.mxu0
      %v409 = vadd.f32 %v334, %v408
      %410 = vdwg.mxu0
      %411 = vmatpush.msra.mxu0 0.0
      %412 = vmatpush.msra.mxu0 0.0
      %413 = vmatpush.msra.mxu0 0.0
      %414 = vmatpush.msra.mxu0 0.0
      %415 = vmatpush.msra.mxu0 0.0
      %416 = vmatpush.msra.mxu0 0.0
      %417 = vmatpush.msra.mxu0 0.0
      %418 = vmatpush.msra.mxu0 0.0
      %419 = vmatpush.msra.mxu0 0.0
      %420 = vmatpush.msra.mxu0 0.0
      %421 = vmatpush.msra.mxu0 0.0
      %422 = vmatpush.msra.mxu0 0.0
      %423 = vmatpush.msra.mxu0 0.0
      %424 = vmatpush.msra.mxu0 0.0
      %425 = vmatpush.msra.mxu0 0.0
      %426 = vmatpush.msra.mxu0 %v369
      %427 = vmatmul.f32.gmra.mxu0 %v363
      %v428 = vpop.f32.mrf.mxu0
      %v429 = vadd.f32 %v354, %v428
      %430 = vdwg.mxu0
      %v431 = vld [vmem:[%s253] sm:$0xff]
      %v432 = vld [vmem:[%s253 + $0x8] sm:$0xf]
      %s433 = scalar_lea.vmem %s248, 16
      %v434 = vld [vmem:[%s433] sm:$0xff]
      %437 = vst [vmem:[#allocation1] ss:$2 sm:$0xff] %v431
      %s438 = scalar_lea.vmem [#allocation1], 16
      %439 = vst [vmem:[%s438] ss:$2 sm:$0xff] %v432
      %v440 = vld.sshfl [vmem:[#allocation1] sm:$0xff pattern:$0x75316420]
      %v441 = vld.sshfl [vmem:[#allocation1 + $0x8] sm:$0xff pattern:$0x75316420]
      %v442 = vld.sshfl [vmem:[#allocation1 + $0x10] sm:$0xff pattern:$0x75316420]
      %443 = vrot.lane.b32.xlu0 %v440, 126
      %v444 = vpop.permute.xlu0 %443
      %445 = vrot.lane.b32.xlu0 %v441, 126
      %v446 = vpop.permute.xlu0 %445
      %447 = vrot.lane.b32.xlu0 %v442, 126
      %v448 = vpop.permute.xlu0 %447
      %vm449 = vcmask 1031168
      %v450 = vsel %vm449, %v444, %v446
      %v451 = vsel %vm449, %v446, %v448
      %v453 = vsel %vm285, %v434, 0
      %v455 = vsel %vm289, %v450, 0
      %v457 = vsel %vm289, %v451, 0
      %v459 = vsel %vm289, %v448, 0
      %461 = vmatpush.msra.mxu0 0.0
      %462 = vmatpush.msra.mxu0 0.0
      %463 = vmatpush.msra.mxu0 0.0
      %464 = vmatpush.msra.mxu0 0.0
      %465 = vmatpush.msra.mxu0 0.0
      %466 = vmatpush.msra.mxu0 0.0
      %467 = vmatpush.msra.mxu0 0.0
      %468 = vmatpush.msra.mxu0 0.0
      %469 = vmatpush.msra.mxu0 0.0
      %470 = vmatpush.msra.mxu0 0.0
      %471 = vmatpush.msra.mxu0 0.0
      %472 = vmatpush.msra.mxu0 0.0
      %473 = vmatpush.msra.mxu0 0.0
      %474 = vmatpush.msra.mxu0 0.0
      %475 = vmatpush.msra.mxu0 0.0
      %476 = vmatpush.msra.mxu0 %v455
      %477 = vmatmul.f32.gmra.mxu0 %v453
      %v478 = vpop.f32.mrf.mxu0
      %v479 = vadd.f32 0.0, %v478
      %480 = vdwg.mxu0
      %481 = vmatpush.msra.mxu0 0.0
      %482 = vmatpush.msra.mxu0 0.0
      %483 = vmatpush.msra.mxu0 0.0
      %484 = vmatpush.msra.mxu0 0.0
      %485 = vmatpush.msra.mxu0 0.0
      %486 = vmatpush.msra.mxu0 0.0
      %487 = vmatpush.msra.mxu0 0.0
      %488 = vmatpush.msra.mxu0 0.0
      %489 = vmatpush.msra.mxu0 0.0
      %490 = vmatpush.msra.mxu0 0.0
      %491 = vmatpush.msra.mxu0 0.0
      %492 = vmatpush.msra.mxu0 0.0
      %493 = vmatpush.msra.mxu0 0.0
      %494 = vmatpush.msra.mxu0 0.0
      %495 = vmatpush.msra.mxu0 0.0
      %496 = vmatpush.msra.mxu0 %v457
      %497 = vmatmul.f32.gmra.mxu0 %v453
      %v498 = vpop.f32.mrf.mxu0
      %v499 = vadd.f32 0.0, %v498
      %500 = vdwg.mxu0
      %501 = vmatpush.msra.mxu0 0.0
      %502 = vmatpush.msra.mxu0 0.0
      %503 = vmatpush.msra.mxu0 0.0
      %504 = vmatpush.msra.mxu0 0.0
      %505 = vmatpush.msra.mxu0 0.0
      %506 = vmatpush.msra.mxu0 0.0
      %507 = vmatpush.msra.mxu0 0.0
      %508 = vmatpush.msra.mxu0 0.0
      %509 = vmatpush.msra.mxu0 0.0
      %510 = vmatpush.msra.mxu0 0.0
      %511 = vmatpush.msra.mxu0 0.0
      %512 = vmatpush.msra.mxu0 0.0
      %513 = vmatpush.msra.mxu0 0.0
      %514 = vmatpush.msra.mxu0 0.0
      %515 = vmatpush.msra.mxu0 0.0
      %516 = vmatpush.msra.mxu0 %v459
      %517 = vmatmul.f32.gmra.mxu0 %v453
      %v518 = vpop.f32.mrf.mxu0
      %v519 = vadd.f32 0.0, %v518
      %520 = vdwg.mxu0
      %v521 = vadd.f32 %v389, %v479
      %v522 = vadd.f32 %v409, %v499
      %v523 = vadd.f32 %v429, %v519
      %v524 = vld [vmem:[%s253] sm:$0xff]
      %v525 = vld [vmem:[%s253 + $0x8] sm:$0xf]
      %s526 = scalar_lea.vmem %s248, 24
      %v527 = vld [vmem:[%s526] sm:$0xff]
      %530 = vst [vmem:[#allocation1] ss:$2 sm:$0xff] %v524
      %s531 = scalar_lea.vmem [#allocation1], 16
      %532 = vst [vmem:[%s531] ss:$2 sm:$0xff] %v525
      %v533 = vld.sshfl [vmem:[#allocation1] sm:$0xff pattern:$0x75316420]
      %v534 = vld.sshfl [vmem:[#allocation1 + $0x8] sm:$0xff pattern:$0x75316420]
      %v535 = vld.sshfl [vmem:[#allocation1 + $0x10] sm:$0xff pattern:$0x75316420]
      %536 = vrot.lane.b32.xlu0 %v533, 110
      %v537 = vpop.permute.xlu0 %536
      %538 = vrot.lane.b32.xlu0 %v534, 110
      %v539 = vpop.permute.xlu0 %538
      %540 = vrot.lane.b32.xlu0 %v535, 110
      %v541 = vpop.permute.xlu0 %540
      %vm542 = vcmask 900096
      %v543 = vsel %vm542, %v537, %v539
      %v544 = vsel %vm542, %v539, %v541
      %v546 = vsel %vm285, %v527, 0
      %v548 = vsel %vm289, %v543, 0
      %v550 = vsel %vm289, %v544, 0
      %v552 = vsel %vm289, %v541, 0
      %554 = vmatpush.msra.mxu0 0.0
      %555 = vmatpush.msra.mxu0 0.0
      %556 = vmatpush.msra.mxu0 0.0
      %557 = vmatpush.msra.mxu0 0.0
      %558 = vmatpush.msra.mxu0 0.0
      %559 = vmatpush.msra.mxu0 0.0
      %560 = vmatpush.msra.mxu0 0.0
      %561 = vmatpush.msra.mxu0 0.0
      %562 = vmatpush.msra.mxu0 0.0
      %563 = vmatpush.msra.mxu0 0.0
      %564 = vmatpush.msra.mxu0 0.0
      %565 = vmatpush.msra.mxu0 0.0
      %566 = vmatpush.msra.mxu0 0.0
      %567 = vmatpush.msra.mxu0 0.0
      %568 = vmatpush.msra.mxu0 0.0
      %569 = vmatpush.msra.mxu0 %v548
      %570 = vmatmul.f32.gmra.mxu0 %v546
      %v571 = vpop.f32.mrf.mxu0
      %v572 = vadd.f32 0.0, %v571
      %573 = vdwg.mxu0
      %574 = vmatpush.msra.mxu0 0.0
      %575 = vmatpush.msra.mxu0 0.0
      %576 = vmatpush.msra.mxu0 0.0
      %577 = vmatpush.msra.mxu0 0.0
      %578 = vmatpush.msra.mxu0 0.0
      %579 = vmatpush.msra.mxu0 0.0
      %580 = vmatpush.msra.mxu0 0.0
      %581 = vmatpush.msra.mxu0 0.0
      %582 = vmatpush.msra.mxu0 0.0
      %583 = vmatpush.msra.mxu0 0.0
      %584 = vmatpush.msra.mxu0 0.0
      %585 = vmatpush.msra.mxu0 0.0
      %586 = vmatpush.msra.mxu0 0.0
      %587 = vmatpush.msra.mxu0 0.0
      %588 = vmatpush.msra.mxu0 0.0
      %589 = vmatpush.msra.mxu0 %v550
      %590 = vmatmul.f32.gmra.mxu0 %v546
      %v591 = vpop.f32.mrf.mxu0
      %v592 = vadd.f32 0.0, %v591
      %593 = vdwg.mxu0
      %594 = vmatpush.msra.mxu0 0.0
      %595 = vmatpush.msra.mxu0 0.0
      %596 = vmatpush.msra.mxu0 0.0
      %597 = vmatpush.msra.mxu0 0.0
      %598 = vmatpush.msra.mxu0 0.0
      %599 = vmatpush.msra.mxu0 0.0
      %600 = vmatpush.msra.mxu0 0.0
      %601 = vmatpush.msra.mxu0 0.0
      %602 = vmatpush.msra.mxu0 0.0
      %603 = vmatpush.msra.mxu0 0.0
      %604 = vmatpush.msra.mxu0 0.0
      %605 = vmatpush.msra.mxu0 0.0
      %606 = vmatpush.msra.mxu0 0.0
      %607 = vmatpush.msra.mxu0 0.0
      %608 = vmatpush.msra.mxu0 0.0
      %609 = vmatpush.msra.mxu0 %v552
      %610 = vmatmul.f32.gmra.mxu0 %v546
      %v611 = vpop.f32.mrf.mxu0
      %v612 = vadd.f32 0.0, %v611
      %613 = vdwg.mxu0
      %v614 = vadd.f32 %v521, %v572
      %v615 = vadd.f32 %v522, %v592
      %v616 = vadd.f32 %v523, %v612
      %v617 = vld [vmem:[%s253] sm:$0xff]
      %v618 = vld [vmem:[%s253 + $0x8] sm:$0xf]
      %s619 = scalar_lea.vmem %s248, 32
      %v620 = vld [vmem:[%s619] sm:$0xff]
      %623 = vst [vmem:[#allocation1] ss:$2 sm:$0xff] %v617
      %s624 = scalar_lea.vmem [#allocation1], 16
      %625 = vst [vmem:[%s624] ss:$2 sm:$0xff] %v618
      %v626 = vld.sshfl [vmem:[#allocation1] sm:$0xff pattern:$0x75316420]
      %v627 = vld.sshfl [vmem:[#allocation1 + $0x8] sm:$0xff pattern:$0x75316420]
      %v628 = vld.sshfl [vmem:[#allocation1 + $0x10] sm:$0xff pattern:$0x75316420]
      %629 = vrot.lane.b32.xlu0 %v626, 109
      %v630 = vpop.permute.xlu0 %629
      %631 = vrot.lane.b32.xlu0 %v627, 109
      %v632 = vpop.permute.xlu0 %631
      %633 = vrot.lane.b32.xlu0 %v628, 109
      %v634 = vpop.permute.xlu0 %633
      %vm635 = vcmask 891904
      %v636 = vsel %vm635, %v630, %v632
      %v637 = vsel %vm635, %v632, %v634
      %v639 = vsel %vm285, %v620, 0
      %v641 = vsel %vm289, %v636, 0
      %v643 = vsel %vm289, %v637, 0
      %v645 = vsel %vm289, %v634, 0
      %647 = vmatpush.msra.mxu0 0.0
      %648 = vmatpush.msra.mxu0 0.0
      %649 = vmatpush.msra.mxu0 0.0
      %650 = vmatpush.msra.mxu0 0.0
      %651 = vmatpush.msra.mxu0 0.0
      %652 = vmatpush.msra.mxu0 0.0
      %653 = vmatpush.msra.mxu0 0.0
      %654 = vmatpush.msra.mxu0 0.0
      %655 = vmatpush.msra.mxu0 0.0
      %656 = vmatpush.msra.mxu0 0.0
      %657 = vmatpush.msra.mxu0 0.0
      %658 = vmatpush.msra.mxu0 0.0
      %659 = vmatpush.msra.mxu0 0.0
      %660 = vmatpush.msra.mxu0 0.0
      %661 = vmatpush.msra.mxu0 0.0
      %662 = vmatpush.msra.mxu0 %v641
      %663 = vmatmul.f32.gmra.mxu0 %v639
      %v664 = vpop.f32.mrf.mxu0
      %v665 = vadd.f32 0.0, %v664
      %666 = vdwg.mxu0
      %667 = vmatpush.msra.mxu0 0.0
      %668 = vmatpush.msra.mxu0 0.0
      %669 = vmatpush.msra.mxu0 0.0
      %670 = vmatpush.msra.mxu0 0.0
      %671 = vmatpush.msra.mxu0 0.0
      %672 = vmatpush.msra.mxu0 0.0
      %673 = vmatpush.msra.mxu0 0.0
      %674 = vmatpush.msra.mxu0 0.0
      %675 = vmatpush.msra.mxu0 0.0
      %676 = vmatpush.msra.mxu0 0.0
      %677 = vmatpush.msra.mxu0 0.0
      %678 = vmatpush.msra.mxu0 0.0
      %679 = vmatpush.msra.mxu0 0.0
      %680 = vmatpush.msra.mxu0 0.0
      %681 = vmatpush.msra.mxu0 0.0
      %682 = vmatpush.msra.mxu0 %v643
      %683 = vmatmul.f32.gmra.mxu0 %v639
      %v684 = vpop.f32.mrf.mxu0
      %v685 = vadd.f32 0.0, %v684
      %686 = vdwg.mxu0
      %687 = vmatpush.msra.mxu0 0.0
      %688 = vmatpush.msra.mxu0 0.0
      %689 = vmatpush.msra.mxu0 0.0
      %690 = vmatpush.msra.mxu0 0.0
      %691 = vmatpush.msra.mxu0 0.0
      %692 = vmatpush.msra.mxu0 0.0
      %693 = vmatpush.msra.mxu0 0.0
      %694 = vmatpush.msra.mxu0 0.0
      %695 = vmatpush.msra.mxu0 0.0
      %696 = vmatpush.msra.mxu0 0.0
      %697 = vmatpush.msra.mxu0 0.0
      %698 = vmatpush.msra.mxu0 0.0
      %699 = vmatpush.msra.mxu0 0.0
      %700 = vmatpush.msra.mxu0 0.0
      %701 = vmatpush.msra.mxu0 0.0
      %702 = vmatpush.msra.mxu0 %v645
      %703 = vmatmul.f32.gmra.mxu0 %v639
      %v704 = vpop.f32.mrf.mxu0
      %v705 = vadd.f32 0.0, %v704
      %706 = vdwg.mxu0
      %v707 = vadd.f32 %v614, %v665
      %v708 = vadd.f32 %v615, %v685
      %v709 = vadd.f32 %v616, %v705
      %v710 = vld [vmem:[%s253] sm:$0xff]
      %v711 = vld [vmem:[%s253 + $0x8] sm:$0xf]
      %s712 = scalar_lea.vmem %s248, 40
      %v713 = vld [vmem:[%s712] sm:$0xff]
      %716 = vst [vmem:[#allocation1] ss:$2 sm:$0xff] %v710
      %s717 = scalar_lea.vmem [#allocation1], 16
      %718 = vst [vmem:[%s717] ss:$2 sm:$0xff] %v711
      %v719 = vld.sshfl [vmem:[#allocation1] sm:$0xff pattern:$0x75316420]
      %v720 = vld.sshfl [vmem:[#allocation1 + $0x8] sm:$0xff pattern:$0x75316420]
      %v721 = vld.sshfl [vmem:[#allocation1 + $0x10] sm:$0xff pattern:$0x75316420]
      %722 = vrot.lane.b32.xlu0 %v719, 108
      %v723 = vpop.permute.xlu0 %722
      %724 = vrot.lane.b32.xlu0 %v720, 108
      %v725 = vpop.permute.xlu0 %724
      %726 = vrot.lane.b32.xlu0 %v721, 108
      %v727 = vpop.permute.xlu0 %726
      %vm728 = vcmask 883712
      %v729 = vsel %vm728, %v723, %v725
      %v730 = vsel %vm728, %v725, %v727
      %v732 = vsel %vm285, %v713, 0
      %v734 = vsel %vm289, %v729, 0
      %v736 = vsel %vm289, %v730, 0
      %v738 = vsel %vm289, %v727, 0
      %740 = vmatpush.msra.mxu0 0.0
      %741 = vmatpush.msra.mxu0 0.0
      %742 = vmatpush.msra.mxu0 0.0
      %743 = vmatpush.msra.mxu0 0.0
      %744 = vmatpush.msra.mxu0 0.0
      %745 = vmatpush.msra.mxu0 0.0
      %746 = vmatpush.msra.mxu0 0.0
      %747 = vmatpush.msra.mxu0 0.0
      %748 = vmatpush.msra.mxu0 0.0
      %749 = vmatpush.msra.mxu0 0.0
      %750 = vmatpush.msra.mxu0 0.0
      %751 = vmatpush.msra.mxu0 0.0
      %752 = vmatpush.msra.mxu0 0.0
      %753 = vmatpush.msra.mxu0 0.0
      %754 = vmatpush.msra.mxu0 0.0
      %755 = vmatpush.msra.mxu0 %v734
      %756 = vmatmul.f32.gmra.mxu0 %v732
      %v757 = vpop.f32.mrf.mxu0
      %v758 = vadd.f32 0.0, %v757
      %759 = vdwg.mxu0
      %760 = vmatpush.msra.mxu0 0.0
      %761 = vmatpush.msra.mxu0 0.0
      %762 = vmatpush.msra.mxu0 0.0
      %763 = vmatpush.msra.mxu0 0.0
      %764 = vmatpush.msra.mxu0 0.0
      %765 = vmatpush.msra.mxu0 0.0
      %766 = vmatpush.msra.mxu0 0.0
      %767 = vmatpush.msra.mxu0 0.0
      %768 = vmatpush.msra.mxu0 0.0
      %769 = vmatpush.msra.mxu0 0.0
      %770 = vmatpush.msra.mxu0 0.0
      %771 = vmatpush.msra.mxu0 0.0
      %772 = vmatpush.msra.mxu0 0.0
      %773 = vmatpush.msra.mxu0 0.0
      %774 = vmatpush.msra.mxu0 0.0
      %775 = vmatpush.msra.mxu0 %v736
      %776 = vmatmul.f32.gmra.mxu0 %v732
      %v777 = vpop.f32.mrf.mxu0
      %v778 = vadd.f32 0.0, %v777
      %779 = vdwg.mxu0
      %780 = vmatpush.msra.mxu0 0.0
      %781 = vmatpush.msra.mxu0 0.0
      %782 = vmatpush.msra.mxu0 0.0
      %783 = vmatpush.msra.mxu0 0.0
      %784 = vmatpush.msra.mxu0 0.0
      %785 = vmatpush.msra.mxu0 0.0
      %786 = vmatpush.msra.mxu0 0.0
      %787 = vmatpush.msra.mxu0 0.0
      %788 = vmatpush.msra.mxu0 0.0
      %789 = vmatpush.msra.mxu0 0.0
      %790 = vmatpush.msra.mxu0 0.0
      %791 = vmatpush.msra.mxu0 0.0
      %792 = vmatpush.msra.mxu0 0.0
      %793 = vmatpush.msra.mxu0 0.0
      %794 = vmatpush.msra.mxu0 0.0
      %795 = vmatpush.msra.mxu0 %v738
      %796 = vmatmul.f32.gmra.mxu0 %v732
      %v797 = vpop.f32.mrf.mxu0
      %v798 = vadd.f32 0.0, %v797
      %799 = vdwg.mxu0
      %v800 = vadd.f32 %v707, %v758
      %v801 = vadd.f32 %v708, %v778
      %v802 = vadd.f32 %v709, %v798
      %v803 = vld [vmem:[%s253] sm:$0xff]
      %v804 = vld [vmem:[%s253 + $0x8] sm:$0xf]
      %s805 = scalar_lea.vmem %s248, 48
      %v806 = vld [vmem:[%s805] sm:$0xff]
      %809 = vst [vmem:[#allocation1] ss:$2 sm:$0xff] %v803
      %s810 = scalar_lea.vmem [#allocation1], 16
      %811 = vst [vmem:[%s810] ss:$2 sm:$0xff] %v804
      %v812 = vld.sshfl [vmem:[#allocation1] sm:$0xff pattern:$0x75316420]
      %v813 = vld.sshfl [vmem:[#allocation1 + $0x8] sm:$0xff pattern:$0x75316420]
      %v814 = vld.sshfl [vmem:[#allocation1 + $0x10] sm:$0xff pattern:$0x75316420]
      %815 = vrot.lane.b32.xlu0 %v812, 92
      %v816 = vpop.permute.xlu0 %815
      %817 = vrot.lane.b32.xlu0 %v813, 92
      %v818 = vpop.permute.xlu0 %817
      %819 = vrot.lane.b32.xlu0 %v814, 92
      %v820 = vpop.permute.xlu0 %819
      %vm821 = vcmask 752640
      %v822 = vsel %vm821, %v816, %v818
      %v823 = vsel %vm821, %v818, %v820
      %v825 = vsel %vm285, %v806, 0
      %v827 = vsel %vm289, %v822, 0
      %v829 = vsel %vm289, %v823, 0
      %v831 = vsel %vm289, %v820, 0
      %833 = vmatpush.msra.mxu0 0.0
      %834 = vmatpush.msra.mxu0 0.0
      %835 = vmatpush.msra.mxu0 0.0
      %836 = vmatpush.msra.mxu0 0.0
      %837 = vmatpush.msra.mxu0 0.0
      %838 = vmatpush.msra.mxu0 0.0
      %839 = vmatpush.msra.mxu0 0.0
      %840 = vmatpush.msra.mxu0 0.0
      %841 = vmatpush.msra.mxu0 0.0
      %842 = vmatpush.msra.mxu0 0.0
      %843 = vmatpush.msra.mxu0 0.0
      %844 = vmatpush.msra.mxu0 0.0
      %845 = vmatpush.msra.mxu0 0.0
      %846 = vmatpush.msra.mxu0 0.0
      %847 = vmatpush.msra.mxu0 0.0
      %848 = vmatpush.msra.mxu0 %v827
      %849 = vmatmul.f32.gmra.mxu0 %v825
      %v850 = vpop.f32.mrf.mxu0
      %v851 = vadd.f32 0.0, %v850
      %852 = vdwg.mxu0
      %853 = vmatpush.msra.mxu0 0.0
      %854 = vmatpush.msra.mxu0 0.0
      %855 = vmatpush.msra.mxu0 0.0
      %856 = vmatpush.msra.mxu0 0.0
      %857 = vmatpush.msra.mxu0 0.0
      %858 = vmatpush.msra.mxu0 0.0
      %859 = vmatpush.msra.mxu0 0.0
      %860 = vmatpush.msra.mxu0 0.0
      %861 = vmatpush.msra.mxu0 0.0
      %862 = vmatpush.msra.mxu0 0.0
      %863 = vmatpush.msra.mxu0 0.0
      %864 = vmatpush.msra.mxu0 0.0
      %865 = vmatpush.msra.mxu0 0.0
      %866 = vmatpush.msra.mxu0 0.0
      %867 = vmatpush.msra.mxu0 0.0
      %868 = vmatpush.msra.mxu0 %v829
      %869 = vmatmul.f32.gmra.mxu0 %v825
      %v870 = vpop.f32.mrf.mxu0
      %v871 = vadd.f32 0.0, %v870
      %872 = vdwg.mxu0
      %873 = vmatpush.msra.mxu0 0.0
      %874 = vmatpush.msra.mxu0 0.0
      %875 = vmatpush.msra.mxu0 0.0
      %876 = vmatpush.msra.mxu0 0.0
      %877 = vmatpush.msra.mxu0 0.0
      %878 = vmatpush.msra.mxu0 0.0
      %879 = vmatpush.msra.mxu0 0.0
      %880 = vmatpush.msra.mxu0 0.0
      %881 = vmatpush.msra.mxu0 0.0
      %882 = vmatpush.msra.mxu0 0.0
      %883 = vmatpush.msra.mxu0 0.0
      %884 = vmatpush.msra.mxu0 0.0
      %885 = vmatpush.msra.mxu0 0.0
      %886 = vmatpush.msra.mxu0 0.0
      %887 = vmatpush.msra.mxu0 0.0
      %888 = vmatpush.msra.mxu0 %v831
      %889 = vmatmul.f32.gmra.mxu0 %v825
      %v890 = vpop.f32.mrf.mxu0
      %v891 = vadd.f32 0.0, %v890
      %892 = vdwg.mxu0
      %v893 = vadd.f32 %v800, %v851
      %v894 = vadd.f32 %v801, %v871
      %v895 = vadd.f32 %v802, %v891
      %v896 = vld [vmem:[%s253] sm:$0xff]
      %v897 = vld [vmem:[%s253 + $0x8] sm:$0xf]
      %s898 = scalar_lea.vmem %s248, 56
      %v899 = vld [vmem:[%s898] sm:$0xff]
      %902 = vst [vmem:[#allocation1] ss:$2 sm:$0xff] %v896
      %s903 = scalar_lea.vmem [#allocation1], 16
      %904 = vst [vmem:[%s903] ss:$2 sm:$0xff] %v897
      %v905 = vld.sshfl [vmem:[#allocation1] sm:$0xff pattern:$0x75316420]
      %v906 = vld.sshfl [vmem:[#allocation1 + $0x8] sm:$0xff pattern:$0x75316420]
      %v907 = vld.sshfl [vmem:[#allocation1 + $0x10] sm:$0xff pattern:$0x75316420]
      %908 = vrot.lane.b32.xlu0 %v905, 91
      %v909 = vpop.permute.xlu0 %908
      %910 = vrot.lane.b32.xlu0 %v906, 91
      %v911 = vpop.permute.xlu0 %910
      %912 = vrot.lane.b32.xlu0 %v907, 91
      %v913 = vpop.permute.xlu0 %912
      %vm914 = vcmask 744448
      %v915 = vsel %vm914, %v909, %v911
      %v916 = vsel %vm914, %v911, %v913
      %v918 = vsel %vm285, %v899, 0
      %v920 = vsel %vm289, %v915, 0
      %v922 = vsel %vm289, %v916, 0
      %v924 = vsel %vm289, %v913, 0
      %926 = vmatpush.msra.mxu0 0.0
      %927 = vmatpush.msra.mxu0 0.0
      %928 = vmatpush.msra.mxu0 0.0
      %929 = vmatpush.msra.mxu0 0.0
      %930 = vmatpush.msra.mxu0 0.0
      %931 = vmatpush.msra.mxu0 0.0
      %932 = vmatpush.msra.mxu0 0.0
      %933 = vmatpush.msra.mxu0 0.0
      %934 = vmatpush.msra.mxu0 0.0
      %935 = vmatpush.msra.mxu0 0.0
      %936 = vmatpush.msra.mxu0 0.0
      %937 = vmatpush.msra.mxu0 0.0
      %938 = vmatpush.msra.mxu0 0.0
      %939 = vmatpush.msra.mxu0 0.0
      %940 = vmatpush.msra.mxu0 0.0
      %941 = vmatpush.msra.mxu0 %v920
      %942 = vmatmul.f32.gmra.mxu0 %v918
      %v943 = vpop.f32.mrf.mxu0
      %v944 = vadd.f32 0.0, %v943
      %945 = vdwg.mxu0
      %946 = vmatpush.msra.mxu0 0.0
      %947 = vmatpush.msra.mxu0 0.0
      %948 = vmatpush.msra.mxu0 0.0
      %949 = vmatpush.msra.mxu0 0.0
      %950 = vmatpush.msra.mxu0 0.0
      %951 = vmatpush.msra.mxu0 0.0
      %952 = vmatpush.msra.mxu0 0.0
      %953 = vmatpush.msra.mxu0 0.0
      %954 = vmatpush.msra.mxu0 0.0
      %955 = vmatpush.msra.mxu0 0.0
      %956 = vmatpush.msra.mxu0 0.0
      %957 = vmatpush.msra.mxu0 0.0
      %958 = vmatpush.msra.mxu0 0.0
      %959 = vmatpush.msra.mxu0 0.0
      %960 = vmatpush.msra.mxu0 0.0
      %961 = vmatpush.msra.mxu0 %v922
      %962 = vmatmul.f32.gmra.mxu0 %v918
      %v963 = vpop.f32.mrf.mxu0
      %v964 = vadd.f32 0.0, %v963
      %965 = vdwg.mxu0
      %966 = vmatpush.msra.mxu0 0.0
      %967 = vmatpush.msra.mxu0 0.0
      %968 = vmatpush.msra.mxu0 0.0
      %969 = vmatpush.msra.mxu0 0.0
      %970 = vmatpush.msra.mxu0 0.0
      %971 = vmatpush.msra.mxu0 0.0
      %972 = vmatpush.msra.mxu0 0.0
      %973 = vmatpush.msra.mxu0 0.0
      %974 = vmatpush.msra.mxu0 0.0
      %975 = vmatpush.msra.mxu0 0.0
      %976 = vmatpush.msra.mxu0 0.0
      %977 = vmatpush.msra.mxu0 0.0
      %978 = vmatpush.msra.mxu0 0.0
      %979 = vmatpush.msra.mxu0 0.0
      %980 = vmatpush.msra.mxu0 0.0
      %981 = vmatpush.msra.mxu0 %v924
      %982 = vmatmul.f32.gmra.mxu0 %v918
      %v983 = vpop.f32.mrf.mxu0
      %v984 = vadd.f32 0.0, %v983
      %985 = vdwg.mxu0
      %v986 = vadd.f32 %v893, %v944
      %v987 = vadd.f32 %v894, %v964
      %v988 = vadd.f32 %v895, %v984
      %v989 = vld [vmem:[%s253] sm:$0xff]
      %v990 = vld [vmem:[%s253 + $0x8] sm:$0xf]
      %s991 = scalar_lea.vmem %s248, 64
      %v992 = vld [vmem:[%s991] sm:$0xff]
      %995 = vst [vmem:[#allocation1] ss:$2 sm:$0xff] %v989
      %s996 = scalar_lea.vmem [#allocation1], 16
      %997 = vst [vmem:[%s996] ss:$2 sm:$0xff] %v990
      %v998 = vld.sshfl [vmem:[#allocation1] sm:$0xff pattern:$0x75316420]
      %v999 = vld.sshfl [vmem:[#allocation1 + $0x8] sm:$0xff pattern:$0x75316420]
      %v1000 = vld.sshfl [vmem:[#allocation1 + $0x10] sm:$0xff pattern:$0x75316420]
      %1001 = vrot.lane.b32.xlu0 %v998, 90
      %v1002 = vpop.permute.xlu0 %1001
      %1003 = vrot.lane.b32.xlu0 %v999, 90
      %v1004 = vpop.permute.xlu0 %1003
      %1005 = vrot.lane.b32.xlu0 %v1000, 90
      %v1006 = vpop.permute.xlu0 %1005
      %vm1007 = vcmask 736256
      %v1008 = vsel %vm1007, %v1002, %v1004
      %v1009 = vsel %vm1007, %v1004, %v1006
      %v1011 = vsel %vm285, %v992, 0
      %v1013 = vsel %vm289, %v1008, 0
      %v1015 = vsel %vm289, %v1009, 0
      %v1017 = vsel %vm289, %v1006, 0
      %1019 = vmatpush.msra.mxu0 0.0
      %1020 = vmatpush.msra.mxu0 0.0
      %1021 = vmatpush.msra.mxu0 0.0
      %1022 = vmatpush.msra.mxu0 0.0
      %1023 = vmatpush.msra.mxu0 0.0
      %1024 = vmatpush.msra.mxu0 0.0
      %1025 = vmatpush.msra.mxu0 0.0
      %1026 = vmatpush.msra.mxu0 0.0
      %1027 = vmatpush.msra.mxu0 0.0
      %1028 = vmatpush.msra.mxu0 0.0
      %1029 = vmatpush.msra.mxu0 0.0
      %1030 = vmatpush.msra.mxu0 0.0
      %1031 = vmatpush.msra.mxu0 0.0
      %1032 = vmatpush.msra.mxu0 0.0
      %1033 = vmatpush.msra.mxu0 0.0
      %1034 = vmatpush.msra.mxu0 %v1013
      %1035 = vmatmul.f32.gmra.mxu0 %v1011
      %v1036 = vpop.f32.mrf.mxu0
      %v1037 = vadd.f32 0.0, %v1036
      %1038 = vdwg.mxu0
      %1039 = vmatpush.msra.mxu0 0.0
      %1040 = vmatpush.msra.mxu0 0.0
      %1041 = vmatpush.msra.mxu0 0.0
      %1042 = vmatpush.msra.mxu0 0.0
      %1043 = vmatpush.msra.mxu0 0.0
      %1044 = vmatpush.msra.mxu0 0.0
      %1045 = vmatpush.msra.mxu0 0.0
      %1046 = vmatpush.msra.mxu0 0.0
      %1047 = vmatpush.msra.mxu0 0.0
      %1048 = vmatpush.msra.mxu0 0.0
      %1049 = vmatpush.msra.mxu0 0.0
      %1050 = vmatpush.msra.mxu0 0.0
      %1051 = vmatpush.msra.mxu0 0.0
      %1052 = vmatpush.msra.mxu0 0.0
      %1053 = vmatpush.msra.mxu0 0.0
      %1054 = vmatpush.msra.mxu0 %v1015
      %1055 = vmatmul.f32.gmra.mxu0 %v1011
      %v1056 = vpop.f32.mrf.mxu0
      %v1057 = vadd.f32 0.0, %v1056
      %1058 = vdwg.mxu0
      %1059 = vmatpush.msra.mxu0 0.0
      %1060 = vmatpush.msra.mxu0 0.0
      %1061 = vmatpush.msra.mxu0 0.0
      %1062 = vmatpush.msra.mxu0 0.0
      %1063 = vmatpush.msra.mxu0 0.0
      %1064 = vmatpush.msra.mxu0 0.0
      %1065 = vmatpush.msra.mxu0 0.0
      %1066 = vmatpush.msra.mxu0 0.0
      %1067 = vmatpush.msra.mxu0 0.0
      %1068 = vmatpush.msra.mxu0 0.0
      %1069 = vmatpush.msra.mxu0 0.0
      %1070 = vmatpush.msra.mxu0 0.0
      %1071 = vmatpush.msra.mxu0 0.0
      %1072 = vmatpush.msra.mxu0 0.0
      %1073 = vmatpush.msra.mxu0 0.0
      %1074 = vmatpush.msra.mxu0 %v1017
      %1075 = vmatmul.f32.gmra.mxu0 %v1011
      %v1076 = vpop.f32.mrf.mxu0
      %v1077 = vadd.f32 0.0, %v1076
      %1078 = vdwg.mxu0
      %v1079 = vadd.f32 %v986, %v1037
      %v1080 = vadd.f32 %v987, %v1057
      %v1081 = vadd.f32 %v988, %v1077
      %s1082 = sld [smem:[#allocation2]]
      %v1083 = vld [vmem:[%s257] sm:$0x7]
      %v1084 = vstv %s1082
      %v1085 = vmul.f32 %v1084, %v1083
      %v1087 = vperm.slane %v1085, 0
      %v1088 = vperm.slane %v1085, 1
      %v1089 = vperm.slane %v1085, 2
      %v1093 = vadd.f32 %v1079, %v1087
      %v1094 = vadd.f32 %v1080, %v1088
      %v1095 = vadd.f32 %v1081, %v1089
      %v1096 = vld [vmem:[%s3] sm:$0xff]
      %1098 = vset.pattern.permute.xlu0 0
      %1099 = vperm.xlu0 %1098, %v1096
      %v1100 = vpop.permute.xlu0 %1099
      %v1102 = vadd.f32 %v1093, %v1100
      %v1103 = vadd.f32 %v1094, %v1100
      %v1104 = vadd.f32 %v1095, %v1100
      %vm1105 = vcmp.ge.f32.partialorder %v1102, 0.0
      %vm1106 = vcmp.ge.f32.partialorder %v1103, 0.0
      %vm1107 = vcmp.ge.f32.partialorder %v1104, 0.0
      %v1108 = vmul.f32 %v1102, 0.2
      %v1109 = vmul.f32 %v1103, 0.2
      %v1110 = vmul.f32 %v1104, 0.2
      %v1111 = vsel %vm1105, %v1102, %v1108
      %v1112 = vsel %vm1106, %v1103, %v1109
      %v1113 = vsel %vm1107, %v1104, %v1110
      %v1114 = vmul.f32 %v1111, 1.4142135
      %v1115 = vmul.f32 %v1112, 1.4142135
      %v1116 = vmul.f32 %v1113, 1.4142135
      %1117 = vst [vmem:[%s262] sm:$0xff] %v1114
      %1118 = vst [vmem:[%s262 + $0x8] sm:$0xff] %v1115
      %vm1119 = vcmask 261120
      %1120 = vst.msk [vmem:[%s262 + $0x10] sm:$0xff] %vm1119, %v1116
      %p1121 = scmp.lt.s32.totalorder %s17, 1
      %s1122 = scalar_select %p1121, %s17, 1
      %s1123 = smul.addr %s1122, 3
      %s1124 = smul.addr %s1123, 8
      %s1125 = scalar_lea.vmem %s5, %s1124
      // Predicated region
      $region41: #{styled_conv.1} parent=39 // pred_check
        %p1126 = pneg %p155
      $region42: #{styled_conv.1} parent=39 // pred_check_branch
        %1128 = sbr.rel (%p1126) target = $region44
      $region43: #{styled_conv.1} parent=39 // pred_region
        _
      $region44: #{styled_conv.1} parent=39 // pred_fallthru
        _
    $region40: #{styled_conv.1} parent=5 // pred_fallthru
      _
    %p1129 = scmp.le.s32.totalorder 2, %s12
    // Predicated region
    $region45: #{styled_conv.1} parent=5 // pred_check
      %p1130 = pneg %p1129
    $region46: #{styled_conv.1} parent=5 // pred_check_branch
      %1132 = sbr.rel (%p1130) target = $region48
    $region47: #{styled_conv.1} parent=5 // pred_region
      %s1133 = ssub.s32 %s12, 2
      // Predicated region
      $region49: #{styled_conv.1} parent=47 // pred_check
        %p1134 = pneg %p161
      $region50: #{styled_conv.1} parent=47 // pred_check_branch
        %1136 = sbr.rel (%p1134) target = $region52
      $region51: #{styled_conv.1} parent=47 // pred_region
        %p1137 = scmp.lt.s32.totalorder %s18, 1
        %s1138 = scalar_select %p1137, %s18, 1
        %s1139 = smul.addr %s1138, 3
        %s1140 = smul.addr %s1139, 8
        %s1141 = scalar_lea.vmem %s5, %s1140
      $region52: #{styled_conv.1} parent=47 // pred_fallthru
        _
    $region48: #{styled_conv.1} parent=5 // pred_fallthru
      _
  $region6: #{styled_conv.1} parent=0 // loop_footer
    %s16 = sadd.s32 1, %s12
  $region7: #{styled_conv.1} parent=0 // loop_footer_branch
    %11 = sbr.rel target = $region3
  $region8: #{styled_conv.1} parent=0 // loop_exit
    _

</llo_original>
